<compile_context>
chip_gen: v7x
topology: tpu7x:2x2x1
jax: 0.10.0
libtpu: 0.0.40
codegen_flags: <defaults>
</compile_context>

<pallas_src>
import functools

import jax
import jax.numpy as jnp
from jax.experimental import pallas as pl
from jax.experimental.pallas import tpu as pltpu


def mlp_kernel(x_ref, w1_ref, b1_ref, w2_ref, b2_ref, w3_ref, b3_ref, o_ref):
    # bf16 MXU matmuls, f32 accumulation, bias-add + relu on the VPU.
    x = x_ref[...]                                            # bf16 (tm, in_p)
    h = jnp.dot(x, w1_ref[...], preferred_element_type=jnp.float32) + b1_ref[...]
    h = jnp.maximum(h, 0.0).astype(jnp.bfloat16)
    h = jnp.dot(h, w2_ref[...], preferred_element_type=jnp.float32) + b2_ref[...]
    h = jnp.maximum(h, 0.0).astype(jnp.bfloat16)
    out = jnp.dot(h, w3_ref[...], preferred_element_type=jnp.float32) + b3_ref[...]
    o_ref[...] = out.astype(o_ref.dtype)                      # f32 (tm, ncls_p)


def _round_up(x, m):
    return (x + m - 1) // m * m


@functools.partial(jax.jit, static_argnames=("tm",))
def neural_net_forward(x, params, *, tm=128):
    """x: (B, input_size) f32. params: dict of w1,b1,w2,b2,w3,b3 (f32).

    Returns (B, num_classes) f32, matching torch's x @ W.T + b per layer
    (weights here are stored (in_features, out_features))."""
    B, in_dim = x.shape
    hid = params["w1"].shape[1]
    ncls = params["w3"].shape[1]

    LANE = 128
    in_p = _round_up(in_dim, LANE)
    hid_p = _round_up(hid, LANE)
    ncls_p = _round_up(ncls, LANE)

    # Batch tile: big enough to fill MXU rows, but don't over-pad tiny batches.
    tm_eff = min(tm, _round_up(B, 8))
    B_p = _round_up(B, tm_eff)

    bf16 = jnp.bfloat16
    # Zero-pad to lane-dense shapes; padded rows/cols contribute nothing and
    # padded hidden units stay exactly 0 through bias-add (0) and relu.
    xp = jnp.zeros((B_p, in_p), bf16).at[:B, :in_dim].set(x.astype(bf16))
    w1 = jnp.zeros((in_p, hid_p), bf16).at[:in_dim, :hid].set(params["w1"].astype(bf16))
    w2 = jnp.zeros((hid_p, hid_p), bf16).at[:hid, :hid].set(params["w2"].astype(bf16))
    w3 = jnp.zeros((hid_p, ncls_p), bf16).at[:hid, :ncls].set(params["w3"].astype(bf16))
    b1 = jnp.zeros((1, hid_p), jnp.float32).at[:, :hid].set(params["b1"])
    b2 = jnp.zeros((1, hid_p), jnp.float32).at[:, :hid].set(params["b2"])
    b3 = jnp.zeros((1, ncls_p), jnp.float32).at[:, :ncls].set(params["b3"])

    grid = (B_p // tm_eff,)

    # Explicit VMEM budget (Pallas double-buffers every input + the output).
    bytes_needed = (
        2 * tm_eff * in_p * 2                                      # x tiles (bf16)
        + 2 * (in_p * hid_p + hid_p * hid_p + hid_p * ncls_p) * 2  # weights (bf16)
        + 2 * (hid_p + hid_p + ncls_p) * 4                         # biases (f32)
        + 2 * tm_eff * ncls_p * 4                                  # out tiles (f32)
    )
    vmem_limit = min(48 * 1024 * 1024, 2 * bytes_needed + (4 << 20))
    # TODO(synk): for very large hidden sizes that overflow VMEM, tile the
    # contraction dims with an f32 accumulator scratch instead of resident weights.

    cost = pl.CostEstimate(
        flops=2 * B_p * (in_p * hid_p + hid_p * hid_p + hid_p * ncls_p),
        transcendentals=0,
        bytes_accessed=(
            xp.size * 2 + w1.size * 2 + w2.size * 2 + w3.size * 2
            + (b1.size + b2.size + b3.size) * 4 + B_p * ncls_p * 4
        ),
    )

    out_full = pl.pallas_call(
        mlp_kernel,
        out_shape=jax.ShapeDtypeStruct((B_p, ncls_p), jnp.float32),
        grid_spec=pltpu.PrefetchScalarGridSpec(
            num_scalar_prefetch=0,
            grid=grid,
            in_specs=[
                # x tiled over batch; params broadcast to every grid step
                # (constant index_map -> fetched once, no re-fetch per step).
                pl.BlockSpec((tm_eff, in_p), lambda i: (i, 0)),
                pl.BlockSpec((in_p, hid_p), lambda i: (0, 0)),
                pl.BlockSpec((1, hid_p), lambda i: (0, 0)),
                pl.BlockSpec((hid_p, hid_p), lambda i: (0, 0)),
                pl.BlockSpec((1, hid_p), lambda i: (0, 0)),
                pl.BlockSpec((hid_p, ncls_p), lambda i: (0, 0)),
                pl.BlockSpec((1, ncls_p), lambda i: (0, 0)),
            ],
            out_specs=pl.BlockSpec((tm_eff, ncls_p), lambda i: (i, 0)),
        ),
        compiler_params=pltpu.CompilerParams(
            dimension_semantics=("parallel",),
            vmem_limit_bytes=vmem_limit,
        ),
        cost_estimate=cost,
    )(xp, w1, b1, w2, b2, w3, b3)

    # Strip batch / class padding.
    return out_full[:B, :ncls]


def init_params(key, input_size, hidden_size, num_classes):
    """Deterministic PyTorch-style init: U(-1/sqrt(fan_in), 1/sqrt(fan_in))."""
    k1, k2, k3, k4, k5, k6 = jax.random.split(key, 6)

    def lin(kw, kb, fan_in, fan_out):
        bound = 1.0 / jnp.sqrt(jnp.float32(fan_in))
        w = jax.random.uniform(kw, (fan_in, fan_out), jnp.float32, -bound, bound)
        b = jax.random.uniform(kb, (1, fan_out), jnp.float32, -bound, bound)
        return w, b

    w1, b1 = lin(k1, k2, input_size, hidden_size)
    w2, b2 = lin(k3, k4, hidden_size, hidden_size)
    w3, b3 = lin(k5, k6, hidden_size, num_classes)
    return dict(w1=w1, b1=b1, w2=w2, b2=b2, w3=w3, b3=b3)


def reference_forward(x, p):
    h = jnp.maximum(x @ p["w1"] + p["b1"], 0.0)
    h = jnp.maximum(h @ p["w2"] + p["b2"], 0.0)
    return h @ p["w3"] + p["b3"]


if __name__ == "__main__":
    key = jax.random.PRNGKey(0)
    kx, kp = jax.random.split(key)

    # Small shapes; batch chosen so the padded grid has 2 steps (tm=128).
    batch, input_size, hidden_size, num_classes = 256, 32, 64, 10
    x = jax.random.normal(kx, (batch, input_size), jnp.float32)
    params = init_params(kp, input_size, hidden_size, num_classes)

    out = neural_net_forward(x, params)
    out = jax.block_until_ready(out)

    ref = reference_forward(x, params)
    assert out.shape == (batch, num_classes)
    # bf16 operands (f32 accumulation) -> loosened tolerance vs. f32 reference.
    assert jnp.allclose(out, ref, atol=3e-2, rtol=3e-2), float(
        jnp.max(jnp.abs(out - ref))
    )
    print("KERNEL_OK")
</pallas_src>

<mosaic_0001>
module attributes {stable_mosaic.version = 11 : i64} {
  func.func @mlp_kernel(%arg0: i32, %arg1: memref<128x128xbf16, #tpu.memory_space<vmem>>, %arg2: memref<128x128xbf16, #tpu.memory_space<vmem>>, %arg3: memref<1x128xf32, #tpu.memory_space<vmem>>, %arg4: memref<128x128xbf16, #tpu.memory_space<vmem>>, %arg5: memref<1x128xf32, #tpu.memory_space<vmem>>, %arg6: memref<128x128xbf16, #tpu.memory_space<vmem>>, %arg7: memref<1x128xf32, #tpu.memory_space<vmem>>, %arg8: memref<128x128xf32, #tpu.memory_space<vmem>>) attributes {dimension_semantics = [#tpu.dimension_semantics<parallel>], iteration_bounds = array<i64: 2>, scalar_prefetch = 0 : i64, scratch_operands = 0 : i64, tpu.core_type = #tpu.core_type<tc>, window_params = [{transform_indices = @transform_0, window_bounds = array<i64: 128, 128>}, {pipeline_mode = #tpu.pipeline_mode<synchronous>, transform_indices = @transform_1, window_bounds = array<i64: 128, 128>}, {pipeline_mode = #tpu.pipeline_mode<synchronous>, transform_indices = @transform_2, window_bounds = array<i64: 1, 128>}, {pipeline_mode = #tpu.pipeline_mode<synchronous>, transform_indices = @transform_3, window_bounds = array<i64: 128, 128>}, {pipeline_mode = #tpu.pipeline_mode<synchronous>, transform_indices = @transform_4, window_bounds = array<i64: 1, 128>}, {pipeline_mode = #tpu.pipeline_mode<synchronous>, transform_indices = @transform_5, window_bounds = array<i64: 128, 128>}, {pipeline_mode = #tpu.pipeline_mode<synchronous>, transform_indices = @transform_6, window_bounds = array<i64: 1, 128>}, {transform_indices = @transform_7, window_bounds = array<i64: 128, 128>}]} {
    %c0 = arith.constant 0 : index
    %c0_0 = arith.constant 0 : index
    %0 = vector.load %arg1[%c0, %c0_0] : memref<128x128xbf16, #tpu.memory_space<vmem>>, vector<128x128xbf16>
    %c0_1 = arith.constant 0 : index
    %c0_2 = arith.constant 0 : index
    %1 = vector.load %arg2[%c0_1, %c0_2] : memref<128x128xbf16, #tpu.memory_space<vmem>>, vector<128x128xbf16>
    %cst = arith.constant dense<0.000000e+00> : vector<128x128xf32>
    %2 = tpu.matmul %0, %1, %cst {dimension_numbers = #tpu.dot_dimension_numbers<[1], [0], [0], [1], [0, 0, 1, 1], [], []>} : vector<128x128xbf16>, vector<128x128xbf16>, vector<128x128xf32> -> vector<128x128xf32>
    %c0_3 = arith.constant 0 : index
    %c0_4 = arith.constant 0 : index
    %3 = vector.load %arg3[%c0_3, %c0_4] : memref<1x128xf32, #tpu.memory_space<vmem>>, vector<1x128xf32>
    %4 = vector.broadcast %3 : vector<1x128xf32> to vector<128x128xf32>
    %5 = arith.addf %2, %4 : vector<128x128xf32>
    %cst_5 = arith.constant 0.000000e+00 : f32
    %6 = vector.broadcast %cst_5 : f32 to vector<128x128xf32>
    %7 = arith.maximumf %5, %6 : vector<128x128xf32>
    %8 = arith.truncf %7 : vector<128x128xf32> to vector<128x128xbf16>
    %c0_6 = arith.constant 0 : index
    %c0_7 = arith.constant 0 : index
    %9 = vector.load %arg4[%c0_6, %c0_7] : memref<128x128xbf16, #tpu.memory_space<vmem>>, vector<128x128xbf16>
    %cst_8 = arith.constant dense<0.000000e+00> : vector<128x128xf32>
    %10 = tpu.matmul %8, %9, %cst_8 {dimension_numbers = #tpu.dot_dimension_numbers<[1], [0], [0], [1], [0, 0, 1, 1], [], []>} : vector<128x128xbf16>, vector<128x128xbf16>, vector<128x128xf32> -> vector<128x128xf32>
    %c0_9 = arith.constant 0 : index
    %c0_10 = arith.constant 0 : index
    %11 = vector.load %arg5[%c0_9, %c0_10] : memref<1x128xf32, #tpu.memory_space<vmem>>, vector<1x128xf32>
    %12 = vector.broadcast %11 : vector<1x128xf32> to vector<128x128xf32>
    %13 = arith.addf %10, %12 : vector<128x128xf32>
    %cst_11 = arith.constant 0.000000e+00 : f32
    %14 = vector.broadcast %cst_11 : f32 to vector<128x128xf32>
    %15 = arith.maximumf %13, %14 : vector<128x128xf32>
    %16 = arith.truncf %15 : vector<128x128xf32> to vector<128x128xbf16>
    %c0_12 = arith.constant 0 : index
    %c0_13 = arith.constant 0 : index
    %17 = vector.load %arg6[%c0_12, %c0_13] : memref<128x128xbf16, #tpu.memory_space<vmem>>, vector<128x128xbf16>
    %cst_14 = arith.constant dense<0.000000e+00> : vector<128x128xf32>
    %18 = tpu.matmul %16, %17, %cst_14 {dimension_numbers = #tpu.dot_dimension_numbers<[1], [0], [0], [1], [0, 0, 1, 1], [], []>} : vector<128x128xbf16>, vector<128x128xbf16>, vector<128x128xf32> -> vector<128x128xf32>
    %c0_15 = arith.constant 0 : index
    %c0_16 = arith.constant 0 : index
    %19 = vector.load %arg7[%c0_15, %c0_16] : memref<1x128xf32, #tpu.memory_space<vmem>>, vector<1x128xf32>
    %20 = vector.broadcast %19 : vector<1x128xf32> to vector<128x128xf32>
    %21 = arith.addf %18, %20 : vector<128x128xf32>
    %c0_17 = arith.constant 0 : index
    %c0_18 = arith.constant 0 : index
    %22 = vector.load %arg8[%c0_17, %c0_18] : memref<128x128xf32, #tpu.memory_space<vmem>>, vector<128x128xf32>
    tpu.vector_store %arg8[%c0_17, %c0_18], %21 {strides = array<i32>} : memref<128x128xf32, #tpu.memory_space<vmem>>, vector<128x128xf32>,
    return
  }
  func.func @transform_0(%arg0: i32) -> (i32, i32) {
    %c0_i32 = arith.constant 0 : i32
    %c0_i32_0 = arith.constant 0 : i32
    return %arg0, %c0_i32 : i32, i32
  }
  func.func @transform_1(%arg0: i32) -> (i32, i32) {
    %c0_i32 = arith.constant 0 : i32
    %c0_i32_0 = arith.constant 0 : i32
    %c0_i32_1 = arith.constant 0 : i32
    return %c0_i32, %c0_i32_0 : i32, i32
  }
  func.func @transform_2(%arg0: i32) -> (i32, i32) {
    %c0_i32 = arith.constant 0 : i32
    %c0_i32_0 = arith.constant 0 : i32
    %c0_i32_1 = arith.constant 0 : i32
    return %c0_i32, %c0_i32_0 : i32, i32
  }
  func.func @transform_3(%arg0: i32) -> (i32, i32) {
    %c0_i32 = arith.constant 0 : i32
    %c0_i32_0 = arith.constant 0 : i32
    %c0_i32_1 = arith.constant 0 : i32
    return %c0_i32, %c0_i32_0 : i32, i32
  }
  func.func @transform_4(%arg0: i32) -> (i32, i32) {
    %c0_i32 = arith.constant 0 : i32
    %c0_i32_0 = arith.constant 0 : i32
    %c0_i32_1 = arith.constant 0 : i32
    return %c0_i32, %c0_i32_0 : i32, i32
  }
  func.func @transform_5(%arg0: i32) -> (i32, i32) {
    %c0_i32 = arith.constant 0 : i32
    %c0_i32_0 = arith.constant 0 : i32
    %c0_i32_1 = arith.constant 0 : i32
    return %c0_i32, %c0_i32_0 : i32, i32
  }
  func.func @transform_6(%arg0: i32) -> (i32, i32) {
    %c0_i32 = arith.constant 0 : i32
    %c0_i32_0 = arith.constant 0 : i32
    %c0_i32_1 = arith.constant 0 : i32
    return %c0_i32, %c0_i32_0 : i32, i32
  }
  func.func @transform_7(%arg0: i32) -> (i32, i32) {
    %c0_i32 = arith.constant 0 : i32
    %c0_i32_0 = arith.constant 0 : i32
    return %arg0, %c0_i32 : i32, i32
  }
}

</mosaic_0001>

<llo_original>
// kernel: neural_net_forward.1
$region0: #{neural_net_forward.1}
  #allocation0 [shape = 'u32[]', space=smem, size = 0x4, offset = 0x4, fixed_abs, tag = 'smem constant byte address 0x4 - core index']
  #allocation1 [shape = 'u32[144,128]{1,0:T(1,128)}', space=vmem, size = 0x12000, scoped, tag = 'internal scratch']
  %s0 = inlined_call_operand.vmem [shape: bf16[256,128], index: 0, kind: input, shape index: {}]
  %s1 = inlined_call_operand.vmem [shape: bf16[128,128], index: 1, kind: input, shape index: {}]
  %s2 = inlined_call_operand.vmem [shape: f32[1,128], index: 2, kind: input, shape index: {}]
  %s3 = inlined_call_operand.vmem [shape: bf16[128,128], index: 3, kind: input, shape index: {}]
  %s4 = inlined_call_operand.vmem [shape: f32[1,128], index: 4, kind: input, shape index: {}]
  %s5 = inlined_call_operand.vmem [shape: bf16[128,128], index: 5, kind: input, shape index: {}]
  %s6 = inlined_call_operand.vmem [shape: f32[1,128], index: 6, kind: input, shape index: {}]
  %s7 = inlined_call_operand.vmem [shape: f32[256,128], index: 7, kind: output, shape index: {}]
  %s8 = sld [smem:[#allocation0]]
  $region61: #{neural_net_forward.1} parent=0
    _
  %s10 = ssub.s32 1, %s8
  %s11 = scalar_select 0, %s10, %s8
  loop: start=0, step=1, limit=4
  $region2: #{neural_net_forward.1} parent=0 // loop_pre_header
    _
  $region3: #{neural_net_forward.1} parent=0 // loop_header
    %s13 = sphi 0, %s17
    %p14 = scmp.ge.s32.totalorder %s13, 4
    %s23 = sphi 0, %s25
    %s26 = sphi 0, %s23
    %s27 = sphi 0, %s26
    %s43 = sphi 0, %s27
    %s47 = sphi 0, %s47
    %s49 = sphi 0, %s47
    %s50 = sphi 0, %s49
    %s64 = sphi 0, %s50
    %s68 = sphi 0, %s68
    %s70 = sphi 0, %s68
    %s71 = sphi 0, %s70
    %s85 = sphi 0, %s71
    %s89 = sphi 0, %s89
    %s91 = sphi 0, %s89
    %s92 = sphi 0, %s91
    %s106 = sphi 0, %s92
    %s110 = sphi 0, %s110
    %s112 = sphi 0, %s110
    %s113 = sphi 0, %s112
    %s127 = sphi 0, %s113
    %s131 = sphi 0, %s131
    %s133 = sphi 0, %s131
    %s134 = sphi 0, %s133
    %s148 = sphi 0, %s134
    %s152 = sphi 0, %s152
    %s154 = sphi 0, %s152
    %s155 = sphi 0, %s154
    %s169 = sphi 0, %s155
    %s175 = sphi 0, %s177
    %s178 = sphi 0, %s175
    %s179 = sphi 0, %s178
    %s195 = sphi 0, %s179
  $region4: #{neural_net_forward.1} parent=0 // loop_header_branch
    %16 = sbr.rel (%p14) target = $region8
  $region5: #{neural_net_forward.1} parent=0 // loop_body
    %s18 = ssub.s32 %s13, 1
    %s19 = ssub.s32 %s13, 2
    %s20 = sadd.s32 %s13, 1
    %s21 = ssub.s32 %s13, %s20
    %p22 = scmp.eq.s32.totalorder %s21, 0
    %s24 = sadd.s32 %s23, 1
    %s25 = scalar_select %p22, %s23, %s24
    %p28 = pneg %p22
    %p29 = scmp.eq.s32.totalorder %s13, 1
    %p30 = por %p28, %p29
    %p31 = scmp.ne.s32.totalorder %s23, %s26
    %p32 = scmp.eq.s32.totalorder %s13, 0
    %p33 = por %p31, %p32
    %p34 = scmp.ne.s32.totalorder %s23, %s26
    %p35 = scmp.eq.s32.totalorder %s18, 1
    %p36 = por %p34, %p35
    %p37 = scmp.ne.s32.totalorder %s26, %s27
    %p38 = scmp.eq.s32.totalorder %s18, 0
    %p39 = por %p37, %p38
    %p40 = scmp.ne.s32.totalorder %s26, %s27
    %p41 = scmp.eq.s32.totalorder %s19, 1
    %p42 = por %p40, %p41
    %p44 = scmp.ne.s32.totalorder %s27, %s43
    %p45 = scmp.eq.s32.totalorder %s19, 0
    %p46 = por %p44, %p45
    %s48 = sadd.s32 %s47, 1
    %p51 = scmp.eq.s32.totalorder %s13, 1
    %p52 = scmp.ne.s32.totalorder %s47, %s49
    %p53 = scmp.eq.s32.totalorder %s13, 0
    %p54 = por %p52, %p53
    %p55 = scmp.ne.s32.totalorder %s47, %s49
    %p56 = scmp.eq.s32.totalorder %s18, 1
    %p57 = por %p55, %p56
    %p58 = scmp.ne.s32.totalorder %s49, %s50
    %p59 = scmp.eq.s32.totalorder %s18, 0
    %p60 = por %p58, %p59
    %p61 = scmp.ne.s32.totalorder %s49, %s50
    %p62 = scmp.eq.s32.totalorder %s19, 1
    %p63 = por %p61, %p62
    %p65 = scmp.ne.s32.totalorder %s50, %s64
    %p66 = scmp.eq.s32.totalorder %s19, 0
    %p67 = por %p65, %p66
    %s69 = sadd.s32 %s68, 1
    %p72 = scmp.eq.s32.totalorder %s13, 1
    %p73 = scmp.ne.s32.totalorder %s68, %s70
    %p74 = scmp.eq.s32.totalorder %s13, 0
    %p75 = por %p73, %p74
    %p76 = scmp.ne.s32.totalorder %s68, %s70
    %p77 = scmp.eq.s32.totalorder %s18, 1
    %p78 = por %p76, %p77
    %p79 = scmp.ne.s32.totalorder %s70, %s71
    %p80 = scmp.eq.s32.totalorder %s18, 0
    %p81 = por %p79, %p80
    %p82 = scmp.ne.s32.totalorder %s70, %s71
    %p83 = scmp.eq.s32.totalorder %s19, 1
    %p84 = por %p82, %p83
    %p86 = scmp.ne.s32.totalorder %s71, %s85
    %p87 = scmp.eq.s32.totalorder %s19, 0
    %p88 = por %p86, %p87
    %s90 = sadd.s32 %s89, 1
    %p93 = scmp.eq.s32.totalorder %s13, 1
    %p94 = scmp.ne.s32.totalorder %s89, %s91
    %p95 = scmp.eq.s32.totalorder %s13, 0
    %p96 = por %p94, %p95
    %p97 = scmp.ne.s32.totalorder %s89, %s91
    %p98 = scmp.eq.s32.totalorder %s18, 1
    %p99 = por %p97, %p98
    %p100 = scmp.ne.s32.totalorder %s91, %s92
    %p101 = scmp.eq.s32.totalorder %s18, 0
    %p102 = por %p100, %p101
    %p103 = scmp.ne.s32.totalorder %s91, %s92
    %p104 = scmp.eq.s32.totalorder %s19, 1
    %p105 = por %p103, %p104
    %p107 = scmp.ne.s32.totalorder %s92, %s106
    %p108 = scmp.eq.s32.totalorder %s19, 0
    %p109 = por %p107, %p108
    %s111 = sadd.s32 %s110, 1
    %p114 = scmp.eq.s32.totalorder %s13, 1
    %p115 = scmp.ne.s32.totalorder %s110, %s112
    %p116 = scmp.eq.s32.totalorder %s13, 0
    %p117 = por %p115, %p116
    %p118 = scmp.ne.s32.totalorder %s110, %s112
    %p119 = scmp.eq.s32.totalorder %s18, 1
    %p120 = por %p118, %p119
    %p121 = scmp.ne.s32.totalorder %s112, %s113
    %p122 = scmp.eq.s32.totalorder %s18, 0
    %p123 = por %p121, %p122
    %p124 = scmp.ne.s32.totalorder %s112, %s113
    %p125 = scmp.eq.s32.totalorder %s19, 1
    %p126 = por %p124, %p125
    %p128 = scmp.ne.s32.totalorder %s113, %s127
    %p129 = scmp.eq.s32.totalorder %s19, 0
    %p130 = por %p128, %p129
    %s132 = sadd.s32 %s131, 1
    %p135 = scmp.eq.s32.totalorder %s13, 1
    %p136 = scmp.ne.s32.totalorder %s131, %s133
    %p137 = scmp.eq.s32.totalorder %s13, 0
    %p138 = por %p136, %p137
    %p139 = scmp.ne.s32.totalorder %s131, %s133
    %p140 = scmp.eq.s32.totalorder %s18, 1
    %p141 = por %p139, %p140
    %p142 = scmp.ne.s32.totalorder %s133, %s134
    %p143 = scmp.eq.s32.totalorder %s18, 0
    %p144 = por %p142, %p143
    %p145 = scmp.ne.s32.totalorder %s133, %s134
    %p146 = scmp.eq.s32.totalorder %s19, 1
    %p147 = por %p145, %p146
    %p149 = scmp.ne.s32.totalorder %s134, %s148
    %p150 = scmp.eq.s32.totalorder %s19, 0
    %p151 = por %p149, %p150
    %s153 = sadd.s32 %s152, 1
    %p156 = scmp.eq.s32.totalorder %s13, 1
    %p157 = scmp.ne.s32.totalorder %s152, %s154
    %p158 = scmp.eq.s32.totalorder %s13, 0
    %p159 = por %p157, %p158
    %p160 = scmp.ne.s32.totalorder %s152, %s154
    %p161 = scmp.eq.s32.totalorder %s18, 1
    %p162 = por %p160, %p161
    %p163 = scmp.ne.s32.totalorder %s154, %s155
    %p164 = scmp.eq.s32.totalorder %s18, 0
    %p165 = por %p163, %p164
    %p166 = scmp.ne.s32.totalorder %s154, %s155
    %p167 = scmp.eq.s32.totalorder %s19, 1
    %p168 = por %p166, %p167
    %p170 = scmp.ne.s32.totalorder %s155, %s169
    %p171 = scmp.eq.s32.totalorder %s19, 0
    %p172 = por %p170, %p171
    %s173 = ssub.s32 %s13, %s20
    %p174 = scmp.eq.s32.totalorder %s173, 0
    %s176 = sadd.s32 %s175, 1
    %s177 = scalar_select %p174, %s175, %s176
    %p180 = pneg %p174
    %p181 = scmp.eq.s32.totalorder %s13, 1
    %p182 = por %p180, %p181
    %p183 = scmp.ne.s32.totalorder %s175, %s178
    %p184 = scmp.eq.s32.totalorder %s13, 0
    %p185 = por %p183, %p184
    %p186 = scmp.ne.s32.totalorder %s175, %s178
    %p187 = scmp.eq.s32.totalorder %s18, 1
    %p188 = por %p186, %p187
    %p189 = scmp.ne.s32.totalorder %s178, %s179
    %p190 = scmp.eq.s32.totalorder %s18, 0
    %p191 = por %p189, %p190
    %p192 = scmp.ne.s32.totalorder %s178, %s179
    %p193 = scmp.eq.s32.totalorder %s19, 1
    %p194 = por %p192, %p193
    %p196 = scmp.ne.s32.totalorder %s179, %s195
    %p197 = scmp.eq.s32.totalorder %s19, 0
    %p198 = por %p196, %p197
    %p199 = scmp.le.s32.totalorder 1, %s13
    %p200 = scmp.lt.s32.totalorder %s13, 3
    %p201 = pnand %p199, %p200
    %p202 = pneg %p201
    // Predicated region
    $region9: #{neural_net_forward.1} parent=5 // pred_check
      _
    $region10: #{neural_net_forward.1} parent=5 // pred_check_branch
      %204 = sbr.rel (%p201) target = $region12
    $region11: #{neural_net_forward.1} parent=5 // pred_region
      %s205 = ssub.s32 %s13, 1
      // Predicated region
      $region13: #{neural_net_forward.1} parent=11 // pred_check
        %p206 = pneg %p60
      $region14: #{neural_net_forward.1} parent=11 // pred_check_branch
        %208 = sbr.rel (%p206) target = $region16
      $region15: #{neural_net_forward.1} parent=11 // pred_region
        _
      $region16: #{neural_net_forward.1} parent=11 // pred_fallthru
        _
      // Predicated region
      $region17: #{neural_net_forward.1} parent=11 // pred_check
        %p209 = pneg %p81
      $region18: #{neural_net_forward.1} parent=11 // pred_check_branch
        %211 = sbr.rel (%p209) target = $region20
      $region19: #{neural_net_forward.1} parent=11 // pred_region
        _
      $region20: #{neural_net_forward.1} parent=11 // pred_fallthru
        _
      // Predicated region
      $region21: #{neural_net_forward.1} parent=11 // pred_check
        %p212 = pneg %p102
      $region22: #{neural_net_forward.1} parent=11 // pred_check_branch
        %214 = sbr.rel (%p212) target = $region24
      $region23: #{neural_net_forward.1} parent=11 // pred_region
        _
      $region24: #{neural_net_forward.1} parent=11 // pred_fallthru
        _
      // Predicated region
      $region25: #{neural_net_forward.1} parent=11 // pred_check
        %p215 = pneg %p123
      $region26: #{neural_net_forward.1} parent=11 // pred_check_branch
        %217 = sbr.rel (%p215) target = $region28
      $region27: #{neural_net_forward.1} parent=11 // pred_region
        _
      $region28: #{neural_net_forward.1} parent=11 // pred_fallthru
        _
      // Predicated region
      $region29: #{neural_net_forward.1} parent=11 // pred_check
        %p218 = pneg %p144
      $region30: #{neural_net_forward.1} parent=11 // pred_check_branch
        %220 = sbr.rel (%p218) target = $region32
      $region31: #{neural_net_forward.1} parent=11 // pred_region
        _
      $region32: #{neural_net_forward.1} parent=11 // pred_fallthru
        _
      // Predicated region
      $region33: #{neural_net_forward.1} parent=11 // pred_check
        %p221 = pneg %p165
      $region34: #{neural_net_forward.1} parent=11 // pred_check_branch
        %223 = sbr.rel (%p221) target = $region36
      $region35: #{neural_net_forward.1} parent=11 // pred_region
        _
      $region36: #{neural_net_forward.1} parent=11 // pred_fallthru
        _
    $region12: #{neural_net_forward.1} parent=5 // pred_fallthru
      _
    %p224 = scmp.lt.s32.totalorder %s13, 2
    // Predicated region
    $region37: #{neural_net_forward.1} parent=5 // pred_check
      %p225 = pneg %p224
    $region38: #{neural_net_forward.1} parent=5 // pred_check_branch
      %227 = sbr.rel (%p225) target = $region40
    $region39: #{neural_net_forward.1} parent=5 // pred_region
      // Predicated region
      $region41: #{neural_net_forward.1} parent=39 // pred_check
        %p228 = pneg %p33
      $region42: #{neural_net_forward.1} parent=39 // pred_check_branch
        %230 = sbr.rel (%p228) target = $region44
      $region43: #{neural_net_forward.1} parent=39 // pred_region
        %s231 = smul.u32 16, %s13
        %p232 = scmp.lt.s32.totalorder %s231, 31
        %s233 = scalar_select %p232, %s231, 31
        %s234 = smul.addr %s233, 4
        %s235 = scalar_lea.vmem %s0, %s234
        %s236 = smul.u32 16, %s13
      $region44: #{neural_net_forward.1} parent=39 // pred_fallthru
        _
    $region40: #{neural_net_forward.1} parent=5 // pred_fallthru
      _
    %p237 = scmp.le.s32.totalorder 1, %s13
    %p238 = scmp.lt.s32.totalorder %s13, 3
    %p239 = pnand %p237, %p238
    %p240 = pneg %p239
    // Predicated region
    $region45: #{neural_net_forward.1} parent=5 // pred_check
      _
    $region46: #{neural_net_forward.1} parent=5 // pred_check_branch
      %242 = sbr.rel (%p239) target = $region48
    $region47: #{neural_net_forward.1} parent=5 // pred_region
      %s243 = ssub.s32 %s13, 1
      %s244 = smul.u32 16, %s18
      %p245 = scmp.lt.s32.totalorder %s244, 31
      %s246 = scalar_select %p245, %s244, 31
      %s247 = smul.addr %s246, 4
      %s248 = scalar_lea.vmem %s0, %s247
      %p249 = pneg %p39
      %p250 = pneg %p36
      %p251 = pneg %p60
      %p252 = pneg %p57
      %p253 = pneg %p81
      %p254 = pneg %p78
      %p255 = pneg %p102
      %p256 = pneg %p99
      %p257 = pneg %p123
      %p258 = pneg %p120
      %p259 = pneg %p144
      %p260 = pneg %p141
      %p261 = pneg %p165
      %p262 = pneg %p162
      %p263 = pneg %p191
      %p264 = pneg %p188
      %s265 = smul.u32 16, %s18
      %p266 = scmp.lt.s32.totalorder %s265, 31
      %s267 = scalar_select %p266, %s265, 31
      %s268 = smul.addr %s267, 8
      %s269 = scalar_lea.vmem %s7, %s268
      %s270 = smul.u32 16, %s18
      %p271 = scmp.lt.s32.totalorder %s270, 31
      %s272 = scalar_select %p271, %s270, 31
      %s273 = smul.addr %s272, 4
      %s274 = scalar_lea.vmem %s0, %s273
      %s275 = smul.u32 16, %s18
      %s276 = smul.u32 16, %s18
      %p277 = scmp.lt.s32.totalorder %s276, 31
      %s278 = scalar_select %p277, %s276, 31
      %s279 = smul.addr %s278, 8
      %s280 = scalar_lea.vmem %s7, %s279
      %s281 = smul.u32 16, %s18
      %v283 = vld [vmem:[%s274] sm:$0xf]
      %v284 = vld [vmem:[%s274 + $0x4] sm:$0xf]
      %v285 = vld [vmem:[%s274 + $0x8] sm:$0xf]
      %v286 = vld [vmem:[%s274 + $0xc] sm:$0xf]
      %v287 = vld [vmem:[%s274 + $0x10] sm:$0xf]
      %v288 = vld [vmem:[%s274 + $0x14] sm:$0xf]
      %v289 = vld [vmem:[%s274 + $0x18] sm:$0xf]
      %v290 = vld [vmem:[%s274 + $0x1c] sm:$0xf]
      %v291 = vld [vmem:[%s274 + $0x20] sm:$0xf]
      %v292 = vld [vmem:[%s274 + $0x24] sm:$0xf]
      %v293 = vld [vmem:[%s274 + $0x28] sm:$0xf]
      %v294 = vld [vmem:[%s274 + $0x2c] sm:$0xf]
      %v295 = vld [vmem:[%s274 + $0x30] sm:$0xf]
      %v296 = vld [vmem:[%s274 + $0x34] sm:$0xf]
      %v297 = vld [vmem:[%s274 + $0x38] sm:$0xf]
      %v298 = vld [vmem:[%s274 + $0x3c] sm:$0xf]
      %v299 = vld [vmem:[%s1] sm:$0xf]
      %v300 = vld [vmem:[%s1 + $0x4] sm:$0xf]
      %v301 = vld [vmem:[%s1 + $0x8] sm:$0xf]
      %v302 = vld [vmem:[%s1 + $0xc] sm:$0xf]
      %v303 = vld [vmem:[%s1 + $0x10] sm:$0xf]
      %v304 = vld [vmem:[%s1 + $0x14] sm:$0xf]
      %v305 = vld [vmem:[%s1 + $0x18] sm:$0xf]
      %v306 = vld [vmem:[%s1 + $0x1c] sm:$0xf]
      %v307 = vld [vmem:[%s1 + $0x20] sm:$0xf]
      %v308 = vld [vmem:[%s1 + $0x24] sm:$0xf]
      %v309 = vld [vmem:[%s1 + $0x28] sm:$0xf]
      %v310 = vld [vmem:[%s1 + $0x2c] sm:$0xf]
      %v311 = vld [vmem:[%s1 + $0x30] sm:$0xf]
      %v312 = vld [vmem:[%s1 + $0x34] sm:$0xf]
      %v313 = vld [vmem:[%s1 + $0x38] sm:$0xf]
      %v314 = vld [vmem:[%s1 + $0x3c] sm:$0xf]
      %v315 = vld [vmem:[%s2] sm:$0x1]
      %v317 = vlaneseq
      %v318 = vshrl.u32 %v317, 7
      %v319 = vsub.s32 0, %v318
      %v320 = vrot.slane %v315, %v319
      %v338 = vunpack.c.l.b16 %v283
      %v339 = vunpack.c.l.b16 %v284
      %v340 = vunpack.c.l.b16 %v285
      %v341 = vunpack.c.l.b16 %v286
      %v342 = vunpack.c.l.b16 %v287
      %v343 = vunpack.c.l.b16 %v288
      %v344 = vunpack.c.l.b16 %v289
      %v345 = vunpack.c.l.b16 %v290
      %v346 = vunpack.c.l.b16 %v291
      %v347 = vunpack.c.l.b16 %v292
      %v348 = vunpack.c.l.b16 %v293
      %v349 = vunpack.c.l.b16 %v294
      %v350 = vunpack.c.l.b16 %v295
      %v351 = vunpack.c.l.b16 %v296
      %v352 = vunpack.c.l.b16 %v297
      %v353 = vunpack.c.l.b16 %v298
      %v354 = vpack.c.b16 %v339, %v338
      %v355 = vpack.c.b16 %v341, %v340
      %v356 = vpack.c.b16 %v343, %v342
      %v357 = vpack.c.b16 %v345, %v344
      %v358 = vpack.c.b16 %v347, %v346
      %v359 = vpack.c.b16 %v349, %v348
      %v360 = vpack.c.b16 %v351, %v350
      %v361 = vpack.c.b16 %v353, %v352
      %v386 = vunpack.c.l.b16 %v299
      %v387 = vunpack.c.l.b16 %v300
      %v388 = vunpack.c.l.b16 %v301
      %v389 = vunpack.c.l.b16 %v302
      %v390 = vunpack.c.l.b16 %v303
      %v391 = vunpack.c.l.b16 %v304
      %v392 = vunpack.c.l.b16 %v305
      %v393 = vunpack.c.l.b16 %v306
      %v394 = vunpack.c.l.b16 %v307
      %v395 = vunpack.c.l.b16 %v308
      %v396 = vunpack.c.l.b16 %v309
      %v397 = vunpack.c.l.b16 %v310
      %v398 = vunpack.c.l.b16 %v311
      %v399 = vunpack.c.l.b16 %v312
      %v400 = vunpack.c.l.b16 %v313
      %v401 = vunpack.c.l.b16 %v314
      %v402 = vpack.c.b16 %v387, %v386
      %v403 = vpack.c.b16 %v389, %v388
      %v404 = vpack.c.b16 %v391, %v390
      %v405 = vpack.c.b16 %v393, %v392
      %v406 = vpack.c.b16 %v395, %v394
      %v407 = vpack.c.b16 %v397, %v396
      %v408 = vpack.c.b16 %v399, %v398
      %v409 = vpack.c.b16 %v401, %v400
      %418 = vmatprep.subr.bf16.mxu0 0
      %419 = vmatpush1.bf16.msra.mxu0 %v402
      %420 = vmatprep.subr.bf16.mxu0 0
      %421 = vmatpush1.bf16.msra.mxu0 %v403
      %422 = vmatprep.subr.bf16.mxu0 0
      %423 = vmatpush1.bf16.msra.mxu0 %v404
      %424 = vmatprep.subr.bf16.mxu0 0
      %425 = vmatpush1.bf16.msra.mxu0 %v405
      %426 = vmatprep.subr.bf16.mxu0 0
      %427 = vmatpush1.bf16.msra.mxu0 %v406
      %428 = vmatprep.subr.bf16.mxu0 0
      %429 = vmatpush1.bf16.msra.mxu0 %v407
      %430 = vmatprep.subr.bf16.mxu0 0
      %431 = vmatpush1.bf16.msra.mxu0 %v408
      %432 = vmatprep.subr.bf16.mxu0 0
      %433 = vmatpush1.bf16.msra.mxu0 %v409
      %434 = vmatprep.subr.bf16.mxu0 0
      %435 = vmatpush1.bf16.msra.mxu0 0
      %436 = vmatprep.subr.bf16.mxu0 0
      %437 = vmatpush1.bf16.msra.mxu0 0
      %438 = vmatprep.subr.bf16.mxu0 0
      %439 = vmatpush1.bf16.msra.mxu0 0
      %440 = vmatprep.subr.bf16.mxu0 0
      %441 = vmatpush1.bf16.msra.mxu0 0
      %442 = vmatprep.subr.bf16.mxu0 0
      %443 = vmatpush1.bf16.msra.mxu0 0
      %444 = vmatprep.subr.bf16.mxu0 0
      %445 = vmatpush1.bf16.msra.mxu0 0
      %446 = vmatprep.subr.bf16.mxu0 0
      %447 = vmatpush1.bf16.msra.mxu0 0
      %448 = vmatprep.subr.bf16.mxu0 0
      %449 = vmatpush1.bf16.msra.mxu0 0
      %450 = vmatprep.mubr.bf16.mxu0 0
      %451 = vmatmul.mubr.bf16.gmra.mrb[0].mxu0 %v354
      %v452 = vpop.f32.mrb[0].mxu0
      %v453 = vadd.f32 %v320, %v452
      %v454 = vpop.f32.mrb[0].mxu0
      %v455 = vpop.f32.mrb[0].mxu0
      %v456 = vadd.f32 %v320, %v455
      %v457 = vpop.f32.mrb[0].mxu0
      %458 = vmatprep.mubr.bf16.mxu0 0
      %459 = vmatmul.mubr.bf16.gmra.mrb[0].mxu0 %v355
      %v460 = vpop.f32.mrb[0].mxu0
      %v461 = vadd.f32 %v320, %v460
      %v462 = vpop.f32.mrb[0].mxu0
      %v463 = vpop.f32.mrb[0].mxu0
      %v464 = vadd.f32 %v320, %v463
      %v465 = vpop.f32.mrb[0].mxu0
      %466 = vmatprep.mubr.bf16.mxu0 0
      %467 = vmatmul.mubr.bf16.gmra.mrb[0].mxu0 %v356
      %v468 = vpop.f32.mrb[0].mxu0
      %v469 = vadd.f32 %v320, %v468
      %v470 = vpop.f32.mrb[0].mxu0
      %v471 = vpop.f32.mrb[0].mxu0
      %v472 = vadd.f32 %v320, %v471
      %v473 = vpop.f32.mrb[0].mxu0
      %474 = vmatprep.mubr.bf16.mxu0 0
      %475 = vmatmul.mubr.bf16.gmra.mrb[0].mxu0 %v357
      %v476 = vpop.f32.mrb[0].mxu0
      %v477 = vadd.f32 %v320, %v476
      %v478 = vpop.f32.mrb[0].mxu0
      %v479 = vpop.f32.mrb[0].mxu0
      %v480 = vadd.f32 %v320, %v479
      %v481 = vpop.f32.mrb[0].mxu0
      %482 = vmatprep.mubr.bf16.mxu0 0
      %483 = vmatmul.mubr.bf16.gmra.mrb[0].mxu0 %v358
      %v484 = vpop.f32.mrb[0].mxu0
      %v485 = vadd.f32 %v320, %v484
      %v486 = vpop.f32.mrb[0].mxu0
      %v487 = vpop.f32.mrb[0].mxu0
      %v488 = vadd.f32 %v320, %v487
      %v489 = vpop.f32.mrb[0].mxu0
      %490 = vmatprep.mubr.bf16.mxu0 0
      %491 = vmatmul.mubr.bf16.gmra.mrb[0].mxu0 %v359
      %v492 = vpop.f32.mrb[0].mxu0
      %v493 = vadd.f32 %v320, %v492
      %v494 = vpop.f32.mrb[0].mxu0
      %v495 = vpop.f32.mrb[0].mxu0
      %v496 = vadd.f32 %v320, %v495
      %v497 = vpop.f32.mrb[0].mxu0
      %498 = vmatprep.mubr.bf16.mxu0 0
      %499 = vmatmul.mubr.bf16.gmra.mrb[0].mxu0 %v360
      %v500 = vpop.f32.mrb[0].mxu0
      %v501 = vadd.f32 %v320, %v500
      %v502 = vpop.f32.mrb[0].mxu0
      %v503 = vpop.f32.mrb[0].mxu0
      %v504 = vadd.f32 %v320, %v503
      %v505 = vpop.f32.mrb[0].mxu0
      %506 = vmatprep.mubr.bf16.mxu0 0
      %507 = vmatmul.mubr.bf16.gmra.mrb[0].mxu0 %v361
      %v508 = vpop.f32.mrb[0].mxu0
      %v509 = vadd.f32 %v320, %v508
      %v510 = vpop.f32.mrb[0].mxu0
      %v511 = vpop.f32.mrb[0].mxu0
      %v512 = vadd.f32 %v320, %v511
      %v513 = vpop.f32.mrb[0].mxu0
      %514 = vdwg.mxu0
      %v515 = vmax.f32 %v453, 0.0
      %v516 = vmax.f32 %v456, 0.0
      %v517 = vmax.f32 %v461, 0.0
      %v518 = vmax.f32 %v464, 0.0
      %v519 = vmax.f32 %v469, 0.0
      %v520 = vmax.f32 %v472, 0.0
      %v521 = vmax.f32 %v477, 0.0
      %v522 = vmax.f32 %v480, 0.0
      %v523 = vmax.f32 %v485, 0.0
      %v524 = vmax.f32 %v488, 0.0
      %v525 = vmax.f32 %v493, 0.0
      %v526 = vmax.f32 %v496, 0.0
      %v527 = vmax.f32 %v501, 0.0
      %v528 = vmax.f32 %v504, 0.0
      %v529 = vmax.f32 %v509, 0.0
      %v530 = vmax.f32 %v512, 0.0
      %v531 = vpack.c.bf16 %v516, %v515
      %v532 = vpack.c.bf16 %v518, %v517
      %v533 = vpack.c.bf16 %v520, %v519
      %v534 = vpack.c.bf16 %v522, %v521
      %v535 = vpack.c.bf16 %v524, %v523
      %v536 = vpack.c.bf16 %v526, %v525
      %v537 = vpack.c.bf16 %v528, %v527
      %v538 = vpack.c.bf16 %v530, %v529
      %v539 = vld [vmem:[%s3] sm:$0xf]
      %v540 = vld [vmem:[%s3 + $0x4] sm:$0xf]
      %v541 = vld [vmem:[%s3 + $0x8] sm:$0xf]
      %v542 = vld [vmem:[%s3 + $0xc] sm:$0xf]
      %v543 = vld [vmem:[%s3 + $0x10] sm:$0xf]
      %v544 = vld [vmem:[%s3 + $0x14] sm:$0xf]
      %v545 = vld [vmem:[%s3 + $0x18] sm:$0xf]
      %v546 = vld [vmem:[%s3 + $0x1c] sm:$0xf]
      %v547 = vld [vmem:[%s3 + $0x20] sm:$0xf]
      %v548 = vld [vmem:[%s3 + $0x24] sm:$0xf]
      %v549 = vld [vmem:[%s3 + $0x28] sm:$0xf]
      %v550 = vld [vmem:[%s3 + $0x2c] sm:$0xf]
      %v551 = vld [vmem:[%s3 + $0x30] sm:$0xf]
      %v552 = vld [vmem:[%s3 + $0x34] sm:$0xf]
      %v553 = vld [vmem:[%s3 + $0x38] sm:$0xf]
      %v554 = vld [vmem:[%s3 + $0x3c] sm:$0xf]
      %v555 = vld [vmem:[%s4] sm:$0x1]
      %v557 = vlaneseq
      %v558 = vshrl.u32 %v557, 7
      %v559 = vsub.s32 0, %v558
      %v560 = vrot.slane %v555, %v559
      %v578 = vunpack.c.l.b16 %v539
      %v579 = vunpack.c.l.b16 %v540
      %v580 = vunpack.c.l.b16 %v541
      %v581 = vunpack.c.l.b16 %v542
      %v582 = vunpack.c.l.b16 %v543
      %v583 = vunpack.c.l.b16 %v544
      %v584 = vunpack.c.l.b16 %v545
      %v585 = vunpack.c.l.b16 %v546
      %v586 = vunpack.c.l.b16 %v547
      %v587 = vunpack.c.l.b16 %v548
      %v588 = vunpack.c.l.b16 %v549
      %v589 = vunpack.c.l.b16 %v550
      %v590 = vunpack.c.l.b16 %v551
      %v591 = vunpack.c.l.b16 %v552
      %v592 = vunpack.c.l.b16 %v553
      %v593 = vunpack.c.l.b16 %v554
      %v594 = vpack.c.b16 %v579, %v578
      %v595 = vpack.c.b16 %v581, %v580
      %v596 = vpack.c.b16 %v583, %v582
      %v597 = vpack.c.b16 %v585, %v584
      %v598 = vpack.c.b16 %v587, %v586
      %v599 = vpack.c.b16 %v589, %v588
      %v600 = vpack.c.b16 %v591, %v590
      %v601 = vpack.c.b16 %v593, %v592
      %610 = vmatprep.subr.bf16.mxu0 0
      %611 = vmatpush1.bf16.msra.mxu0 %v594
      %612 = vmatprep.subr.bf16.mxu0 0
      %613 = vmatpush1.bf16.msra.mxu0 %v595
      %614 = vmatprep.subr.bf16.mxu0 0
      %615 = vmatpush1.bf16.msra.mxu0 %v596
      %616 = vmatprep.subr.bf16.mxu0 0
      %617 = vmatpush1.bf16.msra.mxu0 %v597
      %618 = vmatprep.subr.bf16.mxu0 0
      %619 = vmatpush1.bf16.msra.mxu0 %v598
      %620 = vmatprep.subr.bf16.mxu0 0
      %621 = vmatpush1.bf16.msra.mxu0 %v599
      %622 = vmatprep.subr.bf16.mxu0 0
      %623 = vmatpush1.bf16.msra.mxu0 %v600
      %624 = vmatprep.subr.bf16.mxu0 0
      %625 = vmatpush1.bf16.msra.mxu0 %v601
      %626 = vmatprep.subr.bf16.mxu0 0
      %627 = vmatpush1.bf16.msra.mxu0 0
      %628 = vmatprep.subr.bf16.mxu0 0
      %629 = vmatpush1.bf16.msra.mxu0 0
      %630 = vmatprep.subr.bf16.mxu0 0
      %631 = vmatpush1.bf16.msra.mxu0 0
      %632 = vmatprep.subr.bf16.mxu0 0
      %633 = vmatpush1.bf16.msra.mxu0 0
      %634 = vmatprep.subr.bf16.mxu0 0
      %635 = vmatpush1.bf16.msra.mxu0 0
      %636 = vmatprep.subr.bf16.mxu0 0
      %637 = vmatpush1.bf16.msra.mxu0 0
      %638 = vmatprep.subr.bf16.mxu0 0
      %639 = vmatpush1.bf16.msra.mxu0 0
      %640 = vmatprep.subr.bf16.mxu0 0
      %641 = vmatpush1.bf16.msra.mxu0 0
      %642 = vmatprep.mubr.bf16.mxu0 0
      %643 = vmatmul.mubr.bf16.gmra.mrb[0].mxu0 %v531
      %v644 = vpop.f32.mrb[0].mxu0
      %v645 = vadd.f32 %v560, %v644
      %v646 = vpop.f32.mrb[0].mxu0
      %v647 = vpop.f32.mrb[0].mxu0
      %v648 = vadd.f32 %v560, %v647
      %v649 = vpop.f32.mrb[0].mxu0
      %650 = vmatprep.mubr.bf16.mxu0 0
      %651 = vmatmul.mubr.bf16.gmra.mrb[0].mxu0 %v532
      %v652 = vpop.f32.mrb[0].mxu0
      %v653 = vadd.f32 %v560, %v652
      %v654 = vpop.f32.mrb[0].mxu0
      %v655 = vpop.f32.mrb[0].mxu0
      %v656 = vadd.f32 %v560, %v655
      %v657 = vpop.f32.mrb[0].mxu0
      %658 = vmatprep.mubr.bf16.mxu0 0
      %659 = vmatmul.mubr.bf16.gmra.mrb[0].mxu0 %v533
      %v660 = vpop.f32.mrb[0].mxu0
      %v661 = vadd.f32 %v560, %v660
      %v662 = vpop.f32.mrb[0].mxu0
      %v663 = vpop.f32.mrb[0].mxu0
      %v664 = vadd.f32 %v560, %v663
      %v665 = vpop.f32.mrb[0].mxu0
      %666 = vmatprep.mubr.bf16.mxu0 0
      %667 = vmatmul.mubr.bf16.gmra.mrb[0].mxu0 %v534
      %v668 = vpop.f32.mrb[0].mxu0
      %v669 = vadd.f32 %v560, %v668
      %v670 = vpop.f32.mrb[0].mxu0
      %v671 = vpop.f32.mrb[0].mxu0
      %v672 = vadd.f32 %v560, %v671
      %v673 = vpop.f32.mrb[0].mxu0
      %674 = vmatprep.mubr.bf16.mxu0 0
      %675 = vmatmul.mubr.bf16.gmra.mrb[0].mxu0 %v535
      %v676 = vpop.f32.mrb[0].mxu0
      %v677 = vadd.f32 %v560, %v676
      %v678 = vpop.f32.mrb[0].mxu0
      %v679 = vpop.f32.mrb[0].mxu0
      %v680 = vadd.f32 %v560, %v679
      %v681 = vpop.f32.mrb[0].mxu0
      %682 = vmatprep.mubr.bf16.mxu0 0
      %683 = vmatmul.mubr.bf16.gmra.mrb[0].mxu0 %v536
      %v684 = vpop.f32.mrb[0].mxu0
      %v685 = vadd.f32 %v560, %v684
      %v686 = vpop.f32.mrb[0].mxu0
      %v687 = vpop.f32.mrb[0].mxu0
      %v688 = vadd.f32 %v560, %v687
      %v689 = vpop.f32.mrb[0].mxu0
      %690 = vmatprep.mubr.bf16.mxu0 0
      %691 = vmatmul.mubr.bf16.gmra.mrb[0].mxu0 %v537
      %v692 = vpop.f32.mrb[0].mxu0
      %v693 = vadd.f32 %v560, %v692
      %v694 = vpop.f32.mrb[0].mxu0
      %v695 = vpop.f32.mrb[0].mxu0
      %v696 = vadd.f32 %v560, %v695
      %v697 = vpop.f32.mrb[0].mxu0
      %698 = vmatprep.mubr.bf16.mxu0 0
      %699 = vmatmul.mubr.bf16.gmra.mrb[0].mxu0 %v538
      %v700 = vpop.f32.mrb[0].mxu0
      %v701 = vadd.f32 %v560, %v700
      %v702 = vpop.f32.mrb[0].mxu0
      %v703 = vpop.f32.mrb[0].mxu0
      %v704 = vadd.f32 %v560, %v703
      %v705 = vpop.f32.mrb[0].mxu0
      %706 = vdwg.mxu0
      %v707 = vmax.f32 %v645, 0.0
      %v708 = vmax.f32 %v648, 0.0
      %v709 = vmax.f32 %v653, 0.0
      %v710 = vmax.f32 %v656, 0.0
      %v711 = vmax.f32 %v661, 0.0
      %v712 = vmax.f32 %v664, 0.0
      %v713 = vmax.f32 %v669, 0.0
      %v714 = vmax.f32 %v672, 0.0
      %v715 = vmax.f32 %v677, 0.0
      %v716 = vmax.f32 %v680, 0.0
      %v717 = vmax.f32 %v685, 0.0
      %v718 = vmax.f32 %v688, 0.0
      %v719 = vmax.f32 %v693, 0.0
      %v720 = vmax.f32 %v696, 0.0
      %v721 = vmax.f32 %v701, 0.0
      %v722 = vmax.f32 %v704, 0.0
      %v723 = vpack.c.bf16 %v708, %v707
      %v724 = vpack.c.bf16 %v710, %v709
      %v725 = vpack.c.bf16 %v712, %v711
      %v726 = vpack.c.bf16 %v714, %v713
      %v727 = vpack.c.bf16 %v716, %v715
      %v728 = vpack.c.bf16 %v718, %v717
      %v729 = vpack.c.bf16 %v720, %v719
      %v730 = vpack.c.bf16 %v722, %v721
      %v731 = vld [vmem:[%s5] sm:$0xf]
      %v732 = vld [vmem:[%s5 + $0x4] sm:$0xf]
      %v733 = vld [vmem:[%s5 + $0x8] sm:$0xf]
      %v734 = vld [vmem:[%s5 + $0xc] sm:$0xf]
      %v735 = vld [vmem:[%s5 + $0x10] sm:$0xf]
      %v736 = vld [vmem:[%s5 + $0x14] sm:$0xf]
      %v737 = vld [vmem:[%s5 + $0x18] sm:$0xf]
      %v738 = vld [vmem:[%s5 + $0x1c] sm:$0xf]
      %v739 = vld [vmem:[%s5 + $0x20] sm:$0xf]
      %v740 = vld [vmem:[%s5 + $0x24] sm:$0xf]
      %v741 = vld [vmem:[%s5 + $0x28] sm:$0xf]
      %v742 = vld [vmem:[%s5 + $0x2c] sm:$0xf]
      %v743 = vld [vmem:[%s5 + $0x30] sm:$0xf]
      %v744 = vld [vmem:[%s5 + $0x34] sm:$0xf]
      %v745 = vld [vmem:[%s5 + $0x38] sm:$0xf]
      %v746 = vld [vmem:[%s5 + $0x3c] sm:$0xf]
      %v747 = vld [vmem:[%s6] sm:$0x1]
      %v749 = vlaneseq
      %v750 = vshrl.u32 %v749, 7
      %v751 = vsub.s32 0, %v750
      %v752 = vrot.slane %v747, %v751
      %v770 = vunpack.c.l.b16 %v731
      %v771 = vunpack.c.l.b16 %v732
      %v772 = vunpack.c.l.b16 %v733
      %v773 = vunpack.c.l.b16 %v734
      %v774 = vunpack.c.l.b16 %v735
      %v775 = vunpack.c.l.b16 %v736
      %v776 = vunpack.c.l.b16 %v737
      %v777 = vunpack.c.l.b16 %v738
      %v778 = vunpack.c.l.b16 %v739
      %v779 = vunpack.c.l.b16 %v740
      %v780 = vunpack.c.l.b16 %v741
      %v781 = vunpack.c.l.b16 %v742
      %v782 = vunpack.c.l.b16 %v743
      %v783 = vunpack.c.l.b16 %v744
      %v784 = vunpack.c.l.b16 %v745
      %v785 = vunpack.c.l.b16 %v746
      %v786 = vpack.c.b16 %v771, %v770
      %v787 = vpack.c.b16 %v773, %v772
      %v788 = vpack.c.b16 %v775, %v774
      %v789 = vpack.c.b16 %v777, %v776
      %v790 = vpack.c.b16 %v779, %v778
      %v791 = vpack.c.b16 %v781, %v780
      %v792 = vpack.c.b16 %v783, %v782
      %v793 = vpack.c.b16 %v785, %v784
      %802 = vmatprep.subr.bf16.mxu0 0
      %803 = vmatpush1.bf16.msra.mxu0 %v786
      %804 = vmatprep.subr.bf16.mxu0 0
      %805 = vmatpush1.bf16.msra.mxu0 %v787
      %806 = vmatprep.subr.bf16.mxu0 0
      %807 = vmatpush1.bf16.msra.mxu0 %v788
      %808 = vmatprep.subr.bf16.mxu0 0
      %809 = vmatpush1.bf16.msra.mxu0 %v789
      %810 = vmatprep.subr.bf16.mxu0 0
      %811 = vmatpush1.bf16.msra.mxu0 %v790
      %812 = vmatprep.subr.bf16.mxu0 0
      %813 = vmatpush1.bf16.msra.mxu0 %v791
      %814 = vmatprep.subr.bf16.mxu0 0
      %815 = vmatpush1.bf16.msra.mxu0 %v792
      %816 = vmatprep.subr.bf16.mxu0 0
      %817 = vmatpush1.bf16.msra.mxu0 %v793
      %818 = vmatprep.subr.bf16.mxu0 0
      %819 = vmatpush1.bf16.msra.mxu0 0
      %820 = vmatprep.subr.bf16.mxu0 0
      %821 = vmatpush1.bf16.msra.mxu0 0
      %822 = vmatprep.subr.bf16.mxu0 0
      %823 = vmatpush1.bf16.msra.mxu0 0
      %824 = vmatprep.subr.bf16.mxu0 0
      %825 = vmatpush1.bf16.msra.mxu0 0
      %826 = vmatprep.subr.bf16.mxu0 0
      %827 = vmatpush1.bf16.msra.mxu0 0
      %828 = vmatprep.subr.bf16.mxu0 0
      %829 = vmatpush1.bf16.msra.mxu0 0
      %830 = vmatprep.subr.bf16.mxu0 0
      %831 = vmatpush1.bf16.msra.mxu0 0
      %832 = vmatprep.subr.bf16.mxu0 0
      %833 = vmatpush1.bf16.msra.mxu0 0
      %834 = vmatprep.mubr.bf16.mxu0 0
      %835 = vmatmul.mubr.bf16.gmra.mrb[0].mxu0 %v723
      %v836 = vpop.f32.mrb[0].mxu0
      %v837 = vadd.f32 %v752, %v836
      %v838 = vpop.f32.mrb[0].mxu0
      %v839 = vpop.f32.mrb[0].mxu0
      %v840 = vadd.f32 %v752, %v839
      %v841 = vpop.f32.mrb[0].mxu0
      %842 = vmatprep.mubr.bf16.mxu0 0
      %843 = vmatmul.mubr.bf16.gmra.mrb[0].mxu0 %v724
      %v844 = vpop.f32.mrb[0].mxu0
      %v845 = vadd.f32 %v752, %v844
      %v846 = vpop.f32.mrb[0].mxu0
      %v847 = vpop.f32.mrb[0].mxu0
      %v848 = vadd.f32 %v752, %v847
      %v849 = vpop.f32.mrb[0].mxu0
      %850 = vmatprep.mubr.bf16.mxu0 0
      %851 = vmatmul.mubr.bf16.gmra.mrb[0].mxu0 %v725
      %v852 = vpop.f32.mrb[0].mxu0
      %v853 = vadd.f32 %v752, %v852
      %v854 = vpop.f32.mrb[0].mxu0
      %v855 = vpop.f32.mrb[0].mxu0
      %v856 = vadd.f32 %v752, %v855
      %v857 = vpop.f32.mrb[0].mxu0
      %858 = vmatprep.mubr.bf16.mxu0 0
      %859 = vmatmul.mubr.bf16.gmra.mrb[0].mxu0 %v726
      %v860 = vpop.f32.mrb[0].mxu0
      %v861 = vadd.f32 %v752, %v860
      %v862 = vpop.f32.mrb[0].mxu0
      %v863 = vpop.f32.mrb[0].mxu0
      %v864 = vadd.f32 %v752, %v863
      %v865 = vpop.f32.mrb[0].mxu0
      %866 = vmatprep.mubr.bf16.mxu0 0
      %867 = vmatmul.mubr.bf16.gmra.mrb[0].mxu0 %v727
      %v868 = vpop.f32.mrb[0].mxu0
      %v869 = vadd.f32 %v752, %v868
      %v870 = vpop.f32.mrb[0].mxu0
      %v871 = vpop.f32.mrb[0].mxu0
      %v872 = vadd.f32 %v752, %v871
      %v873 = vpop.f32.mrb[0].mxu0
      %874 = vmatprep.mubr.bf16.mxu0 0
      %875 = vmatmul.mubr.bf16.gmra.mrb[0].mxu0 %v728
      %v876 = vpop.f32.mrb[0].mxu0
      %v877 = vadd.f32 %v752, %v876
      %v878 = vpop.f32.mrb[0].mxu0
      %v879 = vpop.f32.mrb[0].mxu0
      %v880 = vadd.f32 %v752, %v879
      %v881 = vpop.f32.mrb[0].mxu0
      %882 = vmatprep.mubr.bf16.mxu0 0
      %883 = vmatmul.mubr.bf16.gmra.mrb[0].mxu0 %v729
      %v884 = vpop.f32.mrb[0].mxu0
      %v885 = vadd.f32 %v752, %v884
      %v886 = vpop.f32.mrb[0].mxu0
      %v887 = vpop.f32.mrb[0].mxu0
      %v888 = vadd.f32 %v752, %v887
      %v889 = vpop.f32.mrb[0].mxu0
      %890 = vmatprep.mubr.bf16.mxu0 0
      %891 = vmatmul.mubr.bf16.gmra.mrb[0].mxu0 %v730
      %v892 = vpop.f32.mrb[0].mxu0
      %v893 = vadd.f32 %v752, %v892
      %v894 = vpop.f32.mrb[0].mxu0
      %v895 = vpop.f32.mrb[0].mxu0
      %v896 = vadd.f32 %v752, %v895
      %v897 = vpop.f32.mrb[0].mxu0
      %898 = vdwg.mxu0
      %899 = vst [vmem:[%s280] sm:$0xff] %v837
      %900 = vst [vmem:[%s280 + $0x8] sm:$0xff] %v840
      %901 = vst [vmem:[%s280 + $0x10] sm:$0xff] %v845
      %902 = vst [vmem:[%s280 + $0x18] sm:$0xff] %v848
      %903 = vst [vmem:[%s280 + $0x20] sm:$0xff] %v853
      %904 = vst [vmem:[%s280 + $0x28] sm:$0xff] %v856
      %905 = vst [vmem:[%s280 + $0x30] sm:$0xff] %v861
      %906 = vst [vmem:[%s280 + $0x38] sm:$0xff] %v864
      %907 = vst [vmem:[%s280 + $0x40] sm:$0xff] %v869
      %908 = vst [vmem:[%s280 + $0x48] sm:$0xff] %v872
      %909 = vst [vmem:[%s280 + $0x50] sm:$0xff] %v877
      %910 = vst [vmem:[%s280 + $0x58] sm:$0xff] %v880
      %911 = vst [vmem:[%s280 + $0x60] sm:$0xff] %v885
      %912 = vst [vmem:[%s280 + $0x68] sm:$0xff] %v888
      %913 = vst [vmem:[%s280 + $0x70] sm:$0xff] %v893
      %914 = vst [vmem:[%s280 + $0x78] sm:$0xff] %v896
      %s915 = smul.u32 16, %s18
      %p916 = scmp.lt.s32.totalorder %s915, 31
      %s917 = scalar_select %p916, %s915, 31
      %s918 = smul.addr %s917, 8
      %s919 = scalar_lea.vmem %s7, %s918
      // Predicated region
      $region49: #{neural_net_forward.1} parent=47 // pred_check
        %p920 = pneg %p188
      $region50: #{neural_net_forward.1} parent=47 // pred_check_branch
        %922 = sbr.rel (%p920) target = $region52
      $region51: #{neural_net_forward.1} parent=47 // pred_region
        %s923 = smul.u32 16, %s18
      $region52: #{neural_net_forward.1} parent=47 // pred_fallthru
        _
    $region48: #{neural_net_forward.1} parent=5 // pred_fallthru
      _
    %p924 = scmp.le.s32.totalorder 2, %s13
    // Predicated region
    $region53: #{neural_net_forward.1} parent=5 // pred_check
      %p925 = pneg %p924
    $region54: #{neural_net_forward.1} parent=5 // pred_check_branch
      %927 = sbr.rel (%p925) target = $region56
    $region55: #{neural_net_forward.1} parent=5 // pred_region
      %s928 = ssub.s32 %s13, 2
      // Predicated region
      $region57: #{neural_net_forward.1} parent=55 // pred_check
        %p929 = pneg %p194
      $region58: #{neural_net_forward.1} parent=55 // pred_check_branch
        %931 = sbr.rel (%p929) target = $region60
      $region59: #{neural_net_forward.1} parent=55 // pred_region
        %s932 = smul.u32 16, %s19
        %p933 = scmp.lt.s32.totalorder %s932, 31
        %s934 = scalar_select %p933, %s932, 31
        %s935 = smul.addr %s934, 8
        %s936 = scalar_lea.vmem %s7, %s935
      $region60: #{neural_net_forward.1} parent=55 // pred_fallthru
        _
    $region56: #{neural_net_forward.1} parent=5 // pred_fallthru
      _
  $region6: #{neural_net_forward.1} parent=0 // loop_footer
    %s17 = sadd.s32 1, %s13
  $region7: #{neural_net_forward.1} parent=0 // loop_footer_branch
    %12 = sbr.rel target = $region3
  $region8: #{neural_net_forward.1} parent=0 // loop_exit
    _

</llo_original>
